<compile_context>
chip_gen: v7x
topology: tpu7x:2x2x1
jax: 0.10.0
libtpu: 0.0.40
codegen_flags: <defaults>
</compile_context>

<pallas_src>
import functools

import jax
import jax.numpy as jnp
from jax.experimental import pallas as pl
from jax.experimental.pallas import tpu as pltpu


def _round_up(x, m):
    return (x + m - 1) // m * m


def _pick_tile(extent, desired, unit):
    """Largest multiple of `unit` that divides `extent` and is <= desired."""
    desired = max(min(desired, extent), unit)
    t = (desired // unit) * unit
    while extent % t != 0:
        t -= unit
    return t


def _linear_kernel(x_ref, w_ref, o_ref):
    # x_ref: (tm, tk) activation tile
    # w_ref: (tn, tk) weight tile, PyTorch (out_features, in_features) layout
    # o_ref: (tm, tn) f32 output tile, resident across the K grid axis
    #        (its index_map ignores k) -> accumulate directly into it.
    @pl.when(pl.program_id(2) == 0)
    def _():
        o_ref[...] = jnp.zeros_like(o_ref)

    # Contract x's K dim with w's K dim (x @ W.T) directly on the MXU; no
    # pre-transposed copy of W in HBM is ever materialized.
    o_ref[...] += jax.lax.dot_general(
        x_ref[...],
        w_ref[...],
        dimension_numbers=(((1,), (1,)), ((), ())),
        preferred_element_type=jnp.float32,
    ).astype(o_ref.dtype)


@functools.partial(jax.jit, static_argnames=("tm", "tn", "tk"))
def linear_map(x, w, *, tm=512, tn=1024, tk=1024):
    """y = x @ w.T  (nn.Linear(input_dim, input_dim, bias=False) forward).

    x: (B, D) float32
    w: (D, D) float32 in PyTorch (out_features, in_features) layout
    """
    B, D = x.shape
    assert w.shape == (D, D)
    itemsize = x.dtype.itemsize

    # Lane/sublane-aligned extents (f32: sublane 8, lane 128).
    Mp = _round_up(B, 8)
    Np = _round_up(D, 128)   # out_features axis (output lanes)
    Kp = _round_up(D, 128)   # in_features / contraction axis

    # Small-batch / GEMV-like regime: single M block, stream the weight with
    # big N/K tiles so grid steps are few and weight DMAs stay back-to-back.
    if Mp <= 64:
        tm = Mp
        tn = max(tn, 2048)
        tk = max(tk, 1024)

    # Keep a "parallel" grid axis of extent >= 2 for the v7x second TensorCore:
    # if the M grid collapses to 1, split N (when it is large enough).
    tn_cap = Np
    if Mp <= tm and Np >= 256:
        tn_cap = Np // 2

    tm = _pick_tile(Mp, tm, 8)
    tn = _pick_tile(Np, min(tn, tn_cap), 128)
    tk = _pick_tile(Kp, tk, 128)

    # Generation-aware VMEM budget (v5e/v6e: 128 MiB physical, v7x: 64 MiB).
    try:
        vmem_cap = int(pltpu.get_tpu_info().vmem_capacity_bytes)
    except Exception:
        vmem_cap = 64 << 20  # conservative fallback (v7x per-TensorCore VMEM)
    budget = min(max(vmem_cap - (16 << 20), 24 << 20), 100 << 20)

    # Deeper weight buffering only helps when the weight is the streamed
    # operand (small M grid) and there are enough K steps to hide DMA latency.
    w_bufs = 3 if (Mp == tm and Kp // tk >= 3) else 2

    def footprint(tm_, tn_, tk_):
        return (2 * tm_ * tk_ + w_bufs * tn_ * tk_ + 2 * tm_ * tn_) * itemsize

    # Shrink tiles until the pipelined footprint fits the budget.
    while footprint(tm, tn, tk) > budget and (tn > 128 or tk > 128 or tm > 8):
        if tn >= tk and tn > 128:
            tn = _pick_tile(Np, tn // 2, 128)
        elif tk > 128:
            tk = _pick_tile(Kp, tk // 2, 128)
        else:
            tm = _pick_tile(Mp, max(tm // 2, 8), 8)

    vmem_limit = int(min(max(footprint(tm, tn, tk) + (8 << 20), 32 << 20), budget))

    # Zero-pad only when needed. K (contraction) padding MUST stay zero-filled
    # for exactness; M/N padding is sliced off afterwards.
    xp = x if (Mp == B and Kp == D) else jnp.pad(x, ((0, Mp - B), (0, Kp - D)))
    wp = w if (Np == D and Kp == D) else jnp.pad(w, ((0, Np - D), (0, Kp - D)))

    grid = (Mp // tm, Np // tn, Kp // tk)  # K last: resident-output accumulator

    w_spec_kwargs = {}
    if w_bufs == 3:
        w_spec_kwargs["pipeline_mode"] = pl.Buffered(3)

    in_specs = [
        pl.BlockSpec((tm, tk), lambda i, j, k: (i, k)),                 # x tile
        pl.BlockSpec((tn, tk), lambda i, j, k: (j, k), **w_spec_kwargs),  # W tile
    ]

    cost = pl.CostEstimate(
        flops=2 * Mp * Np * Kp,
        transcendentals=0,
        bytes_accessed=(Mp * Kp + Np * Kp + Mp * Np) * itemsize,
    )

    out = pl.pallas_call(
        _linear_kernel,
        out_shape=jax.ShapeDtypeStruct((Mp, Np), x.dtype),
        grid_spec=pltpu.PrefetchScalarGridSpec(
            num_scalar_prefetch=0,
            grid=grid,
            in_specs=in_specs,
            out_specs=pl.BlockSpec((tm, tn), lambda i, j, k: (i, j)),
        ),
        compiler_params=pltpu.CompilerParams(
            dimension_semantics=("parallel", "parallel", "arbitrary"),
            vmem_limit_bytes=vmem_limit,
        ),
        cost_estimate=cost,
    )(xp, wp)

    if (Mp, Np) != (B, D):
        out = out[:B, :D]
    return out


if __name__ == "__main__":
    key = jax.random.PRNGKey(0)
    k_x, k_w = jax.random.split(key)

    batch = 8
    input_dim = 32

    # Deterministic init mimicking nn.Linear's uniform(-1/sqrt(D), 1/sqrt(D)).
    bound = 1.0 / (input_dim ** 0.5)
    w = jax.random.uniform(
        k_w, (input_dim, input_dim), dtype=jnp.float32, minval=-bound, maxval=bound
    )
    x = jax.random.normal(k_x, (batch, input_dim), dtype=jnp.float32)

    y = linear_map(x, w)
    jax.block_until_ready(y)

    # Correctness check against plain JAX reference (f32 accumulation -> tight tol).
    y_ref = x @ w.T
    assert y.shape == (batch, input_dim)
    assert jnp.allclose(y, y_ref, atol=1e-5, rtol=1e-5)

    print("KERNEL_OK")
</pallas_src>

<mosaic_0001>
module attributes {stable_mosaic.version = 11 : i64} {
  func.func @_linear_kernel(%arg0: i32, %arg1: i32, %arg2: i32, %arg3: memref<8x128xf32, #tpu.memory_space<vmem>>, %arg4: memref<128x128xf32, #tpu.memory_space<vmem>>, %arg5: memref<8x128xf32, #tpu.memory_space<vmem>>) attributes {dimension_semantics = [#tpu.dimension_semantics<parallel>, #tpu.dimension_semantics<parallel>, #tpu.dimension_semantics<arbitrary>], iteration_bounds = array<i64: 1, 1, 1>, scalar_prefetch = 0 : i64, scratch_operands = 0 : i64, tpu.core_type = #tpu.core_type<tc>, window_params = [{transform_indices = @transform_0, window_bounds = array<i64: 8, 128>}, {transform_indices = @transform_1, window_bounds = array<i64: 128, 128>}, {transform_indices = @transform_2, window_bounds = array<i64: 8, 128>}]} {
    %c0_i32 = arith.constant 0 : i32
    %0 = arith.cmpi eq, %arg2, %c0_i32 : i32
    %1 = arith.extui %0 : i1 to i32
    %c0_i32_0 = arith.constant 0 : i32
    %2 = arith.cmpi ne, %1, %c0_i32_0 : i32
    scf.if %2 {
      %cst_8 = arith.constant 0.000000e+00 : f32
      %9 = vector.broadcast %cst_8 : f32 to vector<8x128xf32>
      %c0_9 = arith.constant 0 : index
      %c0_10 = arith.constant 0 : index
      %10 = vector.load %arg5[%c0_9, %c0_10] : memref<8x128xf32, #tpu.memory_space<vmem>>, vector<8x128xf32>
      tpu.vector_store %arg5[%c0_9, %c0_10], %9 {strides = array<i32>} : memref<8x128xf32, #tpu.memory_space<vmem>>, vector<8x128xf32>,
    } else {
    }
    %c0 = arith.constant 0 : index
    %c0_1 = arith.constant 0 : index
    %3 = vector.load %arg5[%c0, %c0_1] : memref<8x128xf32, #tpu.memory_space<vmem>>, vector<8x128xf32>
    %c0_2 = arith.constant 0 : index
    %c0_3 = arith.constant 0 : index
    %4 = vector.load %arg3[%c0_2, %c0_3] : memref<8x128xf32, #tpu.memory_space<vmem>>, vector<8x128xf32>
    %c0_4 = arith.constant 0 : index
    %c0_5 = arith.constant 0 : index
    %5 = vector.load %arg4[%c0_4, %c0_5] : memref<128x128xf32, #tpu.memory_space<vmem>>, vector<128x128xf32>
    %cst = arith.constant dense<0.000000e+00> : vector<8x128xf32>
    %6 = tpu.matmul %4, %5, %cst {dimension_numbers = #tpu.dot_dimension_numbers<[1], [1], [0], [0], [0, 0, 1, 0], [], []>} : vector<8x128xf32>, vector<128x128xf32>, vector<8x128xf32> -> vector<8x128xf32>
    %7 = arith.addf %3, %6 : vector<8x128xf32>
    %c0_6 = arith.constant 0 : index
    %c0_7 = arith.constant 0 : index
    %8 = vector.load %arg5[%c0_6, %c0_7] : memref<8x128xf32, #tpu.memory_space<vmem>>, vector<8x128xf32>
    tpu.vector_store %arg5[%c0_6, %c0_7], %7 {strides = array<i32>} : memref<8x128xf32, #tpu.memory_space<vmem>>, vector<8x128xf32>,
    return
  }
  func.func @transform_0(%arg0: i32, %arg1: i32, %arg2: i32) -> (i32, i32) {
    %c0_i32 = arith.constant 0 : i32
    return %arg0, %arg2 : i32, i32
  }
  func.func @transform_1(%arg0: i32, %arg1: i32, %arg2: i32) -> (i32, i32) {
    %c0_i32 = arith.constant 0 : i32
    return %arg1, %arg2 : i32, i32
  }
  func.func @transform_2(%arg0: i32, %arg1: i32, %arg2: i32) -> (i32, i32) {
    %c0_i32 = arith.constant 0 : i32
    return %arg0, %arg1 : i32, i32
  }
}

</mosaic_0001>

<llo_original>
// kernel: linear_map.1
$region0: #{linear_map.1}
  #allocation0 [shape = 'u32[]', space=smem, size = 0x4, offset = 0x4, fixed_abs, tag = 'smem constant byte address 0x4 - core index']
  #allocation1 [shape = 'u32[144,128]{1,0:T(1,128)}', space=vmem, size = 0x12000, scoped, tag = 'internal scratch']
  %s0 = inlined_call_operand.vmem [shape: f32[8,128], index: 0, kind: input, shape index: {}]
  %s1 = inlined_call_operand.vmem [shape: f32[128,128], index: 1, kind: input, shape index: {}]
  %s2 = inlined_call_operand.hbm [shape: f32[8,128], index: 2, kind: output, shape index: {}]
  %s3 = sld [smem:[#allocation0]]
  $region22: #{linear_map.1} parent=0
    _
  %s5 = ssub.s32 1, %s3
  %s6 = scalar_select 0, %s5, %s3
  $region1: #{linear_map.1} parent=0
    #allocation2 [shape = 'u8[4096]{0}', space=vmem, size = 0x1000, scoped, tag = 'output window, operand 0, single buffered']
    #allocation3 [shape = 's32[1]{0}', space=sflag, size = 0x4, scoped, tag = 'scoped memory for linear_map.1']
    %7 = vsyncpa [#allocation3], 0
    // Predicated region
    $region2: #{linear_map.1} parent=1 // pred_check
      _
    $region3: #{linear_map.1} parent=1 // pred_check_branch
      %9 = sbr.rel (0) target = $region5
    $region4: #{linear_map.1} parent=1 // pred_region
      _
    $region5: #{linear_map.1} parent=1 // pred_fallthru
      _
    // Predicated region
    $region6: #{linear_map.1} parent=1 // pred_check
      _
    $region7: #{linear_map.1} parent=1 // pred_check_branch
      %11 = sbr.rel (0) target = $region9
    $region8: #{linear_map.1} parent=1 // pred_region
      _
    $region9: #{linear_map.1} parent=1 // pred_fallthru
      _
    %p12 = scmp.eq.s32.totalorder 0, 0
    // Predicated region
    $region10: #{linear_map.1} parent=1 // pred_check
      %p13 = pneg %p12
    $region11: #{linear_map.1} parent=1 // pred_check_branch
      %15 = sbr.rel (%p13) target = $region13
    $region12: #{linear_map.1} parent=1 // pred_region
      %16 = vst [vmem:[#allocation2] sm:$0xff] 0.0
    $region13: #{linear_map.1} parent=1 // pred_fallthru
      _
    %v17 = vld [vmem:[#allocation2] sm:$0xff]
    %v18 = vld [vmem:[%s0] sm:$0xff]
    %v19 = vld [vmem:[%s1] sm:$0xff]
    %v20 = vld [vmem:[%s1 + $0x8] sm:$0xff]
    %v21 = vld [vmem:[%s1 + $0x10] sm:$0xff]
    %v22 = vld [vmem:[%s1 + $0x18] sm:$0xff]
    %v23 = vld [vmem:[%s1 + $0x20] sm:$0xff]
    %v24 = vld [vmem:[%s1 + $0x28] sm:$0xff]
    %v25 = vld [vmem:[%s1 + $0x30] sm:$0xff]
    %v26 = vld [vmem:[%s1 + $0x38] sm:$0xff]
    %v27 = vld [vmem:[%s1 + $0x40] sm:$0xff]
    %v28 = vld [vmem:[%s1 + $0x48] sm:$0xff]
    %v29 = vld [vmem:[%s1 + $0x50] sm:$0xff]
    %v30 = vld [vmem:[%s1 + $0x58] sm:$0xff]
    %v31 = vld [vmem:[%s1 + $0x60] sm:$0xff]
    %v32 = vld [vmem:[%s1 + $0x68] sm:$0xff]
    %v33 = vld [vmem:[%s1 + $0x70] sm:$0xff]
    %v34 = vld [vmem:[%s1 + $0x78] sm:$0xff]
    %35 = vmatprep.subr.mxu0 0.0
    %36 = vmatpush1.xpose.msra.mxu0 %v19
    %37 = vmatprep.subr.mxu0 0.0
    %38 = vmatpush1.xpose.msra.mxu0 %v20
    %39 = vmatprep.subr.mxu0 0.0
    %40 = vmatpush1.xpose.msra.mxu0 %v21
    %41 = vmatprep.subr.mxu0 0.0
    %42 = vmatpush1.xpose.msra.mxu0 %v22
    %43 = vmatprep.subr.mxu0 0.0
    %44 = vmatpush1.xpose.msra.mxu0 %v23
    %45 = vmatprep.subr.mxu0 0.0
    %46 = vmatpush1.xpose.msra.mxu0 %v24
    %47 = vmatprep.subr.mxu0 0.0
    %48 = vmatpush1.xpose.msra.mxu0 %v25
    %49 = vmatprep.subr.mxu0 0.0
    %50 = vmatpush1.xpose.msra.mxu0 %v26
    %51 = vmatprep.subr.mxu0 0.0
    %52 = vmatpush1.xpose.msra.mxu0 %v27
    %53 = vmatprep.subr.mxu0 0.0
    %54 = vmatpush1.xpose.msra.mxu0 %v28
    %55 = vmatprep.subr.mxu0 0.0
    %56 = vmatpush1.xpose.msra.mxu0 %v29
    %57 = vmatprep.subr.mxu0 0.0
    %58 = vmatpush1.xpose.msra.mxu0 %v30
    %59 = vmatprep.subr.mxu0 0.0
    %60 = vmatpush1.xpose.msra.mxu0 %v31
    %61 = vmatprep.subr.mxu0 0.0
    %62 = vmatpush1.xpose.msra.mxu0 %v32
    %63 = vmatprep.subr.mxu0 0.0
    %64 = vmatpush1.xpose.msra.mxu0 %v33
    %65 = vmatprep.subr.mxu0 0.0
    %66 = vmatpush1.xpose.msra.mxu0 %v34
    %67 = vmatprep.subr.mxu0 0.0
    %68 = vmatpush1.xpose.msra.mxu0 0.0
    %69 = vmatprep.subr.mxu0 0.0
    %70 = vmatpush1.xpose.msra.mxu0 0.0
    %71 = vmatprep.subr.mxu0 0.0
    %72 = vmatpush1.xpose.msra.mxu0 0.0
    %73 = vmatprep.subr.mxu0 0.0
    %74 = vmatpush1.xpose.msra.mxu0 0.0
    %75 = vmatprep.subr.mxu0 0.0
    %76 = vmatpush1.xpose.msra.mxu0 0.0
    %77 = vmatprep.subr.mxu0 0.0
    %78 = vmatpush1.xpose.msra.mxu0 0.0
    %79 = vmatprep.subr.mxu0 0.0
    %80 = vmatpush1.xpose.msra.mxu0 0.0
    %81 = vmatprep.subr.mxu0 0.0
    %82 = vmatpush1.xpose.msra.mxu0 0.0
    %83 = vmatprep.subr.mxu0 0.0
    %84 = vmatpush1.xpose.msra.mxu0 0.0
    %85 = vmatprep.subr.mxu0 0.0
    %86 = vmatpush1.xpose.msra.mxu0 0.0
    %87 = vmatprep.subr.mxu0 0.0
    %88 = vmatpush1.xpose.msra.mxu0 0.0
    %89 = vmatprep.subr.mxu0 0.0
    %90 = vmatpush1.xpose.msra.mxu0 0.0
    %91 = vmatprep.subr.mxu0 0.0
    %92 = vmatpush1.xpose.msra.mxu0 0.0
    %93 = vmatprep.subr.mxu0 0.0
    %94 = vmatpush1.xpose.msra.mxu0 0.0
    %95 = vmatprep.subr.mxu0 0.0
    %96 = vmatpush1.xpose.msra.mxu0 0.0
    %97 = vmatprep.subr.mxu0 0.0
    %98 = vmatpush1.xpose.msra.mxu0 0.0
    %99 = vmatprep.mubr.f32.mxu0 0.0
    %100 = vmatmul.mubr.f32.gmra.mrb[0].mxu0 %v18
    %v101 = vpop.f32.mrb[0].mxu0
    %v102 = vadd.f32 0.0, %v101
    %v103 = vpop.f32.mrb[0].mxu0
    %104 = vdwg.mxu0
    %v105 = vadd.f32 %v17, %v102
    %106 = vst [vmem:[#allocation2] sm:$0xff] %v105
    // Predicated region
    $region14: #{linear_map.1} parent=1 // pred_check
      _
    $region15: #{linear_map.1} parent=1 // pred_check_branch
      %108 = sbr.rel (0) target = $region17
    $region16: #{linear_map.1} parent=1 // pred_region
      %s110 = ssub.s32 128, 128
      %111 = vsyncadd [#allocation3], %s110
      %s113 = sshll.u32 [#allocation2], 4
      %s114 = int_to_ptr.vmem [resolvable:$true] %s113
      %116 = dma.vmem_to_hbm [thread:$0]  %s114, 128, %s2, [#allocation3]
    $region17: #{linear_map.1} parent=1 // pred_fallthru
      _
    // Predicated region
    $region18: #{linear_map.1} parent=1 // pred_check
      _
    $region19: #{linear_map.1} parent=1 // pred_check_branch
      %118 = sbr.rel (0) target = $region21
    $region20: #{linear_map.1} parent=1 // pred_region
      %119 = dma.done [#allocation3], 128
    $region21: #{linear_map.1} parent=1 // pred_fallthru
      _
    %120 = vsyncpa [#allocation3], 1

</llo_original>
